<compile_context>
chip_gen: v7x
topology: tpu7x:2x2x1
jax: 0.10.0
libtpu: 0.0.40
codegen_flags: <defaults>
</compile_context>

<pallas_src>
import numpy as np
import jax
import jax.numpy as jnp
from jax.experimental import pallas as pl
from jax.experimental.pallas import tpu as pltpu

PATCH = 25          # MaxPool1d(25, stride=25)
BN_EPS = 1e-5


# --------------------------------------------------------------------------
# kernel A: per-peak mean of raw x (block of B_t samples)  +  /25 max pool
# --------------------------------------------------------------------------
def _x_region_and_pool_kernel(x_ref, off_ref, len_ref, scl_ref, xr_ref, xp_ref):
    # x_ref  : (B_t, L, D)        raw x for B_t samples (D lane-dense)
    # off/len: (1, B_t*maxP, 1)   int32 block-local peak start / length
    # scl    : (1, B_t*maxP, 1)   f32 1/length (0 for padded peaks)
    # xr_ref : (1, B_t*maxP, D)   per-peak means of x (f32)
    # xp_ref : (1, B_t*L25, D)    /PATCH max pool of x (bf16, feeds kernel B)
    Bt, L, D = x_ref.shape
    R = xr_ref.shape[1]
    Np = xp_ref.shape[1]
    L25 = Np // Bt
    patch = L // L25
    NL = Bt * L

    # ---- /patch max pool: max tree over the `patch` stride-`patch` phases ----
    m = x_ref[:, pl.ds(0, L25, stride=patch), :]
    for k in range(1, patch):
        m = jnp.maximum(m, x_ref[:, pl.ds(k, L25, stride=patch), :])
    xp_ref[0] = m.reshape(Np, D).astype(jnp.bfloat16)

    # ---- per-peak mean: 0/1 bf16 block-diagonal selection, one MXU matmul,
    #      1/length applied in f32 AFTER the matmul (accuracy + bandwidth) ----
    x2 = x_ref[...].reshape(NL, D).astype(jnp.bfloat16)       # one hoisted cast
    cols = jax.lax.broadcasted_iota(jnp.int32, (R, NL), 1)
    off = off_ref[0]
    sel = (cols >= off) & (cols < off + len_ref[0])
    xr_ref[0] = jnp.dot(sel.astype(jnp.bfloat16), x2,
                        preferred_element_type=jnp.float32) * scl_ref[0]


def x_region_and_pool(x, off_a, len_a, scl_a, B_t, L25, maxP):
    B, L, D = x.shape
    G = B // B_t
    R = B_t * maxP
    Np = B_t * L25
    return pl.pallas_call(
        _x_region_and_pool_kernel,
        out_shape=(jax.ShapeDtypeStruct((G, R, D), jnp.float32),
                   jax.ShapeDtypeStruct((G, Np, D), jnp.bfloat16)),
        grid=(G,),
        in_specs=[pl.BlockSpec((B_t, L, D), lambda g: (g, 0, 0)),
                  pl.BlockSpec((1, R, 1), lambda g: (g, 0, 0)),
                  pl.BlockSpec((1, R, 1), lambda g: (g, 0, 0)),
                  pl.BlockSpec((1, R, 1), lambda g: (g, 0, 0))],
        out_specs=(pl.BlockSpec((1, R, D), lambda g: (g, 0, 0)),
                   pl.BlockSpec((1, Np, D), lambda g: (g, 0, 0))),
        compiler_params=pltpu.CompilerParams(dimension_semantics=("parallel",)),
    )(x, off_a, len_a, scl_a)


# --------------------------------------------------------------------------
# kernel B: fused post-pool pipeline (single invocation; BN batch statistics)
# --------------------------------------------------------------------------
def _make_joint_kernel(binary_atac, L25):
    def kernel(xp_ref, at_ref, wa_ref, wj_ref, off_ref, len_ref, scl_ref, out_ref):
        # xp_ref : (N, D)      bf16  pooled x, N = B*L25 (flattened, D lane-dense)
        # at_ref : (N, PATCH)  f32   raw atac windows
        # wa_ref : (3, A)      f32   atac conv taps (Cin=1)
        # wj_ref : (D+A, 3*J)  bf16  packed joint conv weight (tap-major columns)
        # off/len/scl: (R, 1)        global (flattened) per-peak start/len/1/len
        # out_ref: (R, J)      f32   log2(1 + per-peak mean of relu(BN(joint conv)))
        f32 = jnp.float32
        N = xp_ref.shape[0]
        J = out_ref.shape[1]
        R = out_ref.shape[0]

        rmod = jax.lax.broadcasted_iota(jnp.int32, (N, 1), 0) % L25
        first_row = rmod == 0
        last_row = rmod == (L25 - 1)

        def shift_down(v):   # row r <- v[r-1]; first row of each sample <- 0
            return jnp.where(first_row, 0.0, pltpu.roll(v, shift=1, axis=0))

        def shift_up(v):     # row r <- v[r+1]; last row of each sample <- 0
            return jnp.where(last_row, 0.0,
                             pltpu.roll(v, shift=v.shape[0] - 1, axis=0))

        # -- atac: max-pool the RAW window first, transform the pooled column.
        #    Exact because log10(1+.) and (.>0) are monotone non-decreasing.
        #    TODO(synk): revert to transform-then-pool if a non-monotone atac
        #    transform is ever added.
        a_raw = jnp.max(at_ref[...], axis=1, keepdims=True)            # (N, 1)
        if binary_atac:
            a_pool = (a_raw > 0).astype(f32)
        else:
            a_pool = jnp.log10(a_raw + 1.0)

        # -- atac conv (Cin=1): VPU broadcast + BN (batch stats) + ReLU --
        wa = wa_ref[...]
        y_a = (shift_down(a_pool) * wa[0:1, :]
               + a_pool * wa[1:2, :]
               + shift_up(a_pool) * wa[2:3, :])                        # (N, A)
        mu_a = jnp.mean(y_a, axis=0, keepdims=True)
        da = y_a - mu_a
        var_a = jnp.mean(da * da, axis=0, keepdims=True)
        a_act = jnp.maximum(da * jax.lax.rsqrt(var_a + BN_EPS), 0.0)

        # -- joint conv: ONE packed bf16 matmul (K = D+A, 3*J output columns);
        #    the 3 J-wide tap groups are combined with rolls + boundary masks --
        x_cat = jnp.concatenate([xp_ref[...], a_act.astype(jnp.bfloat16)],
                                axis=1)                                # (N, D+A)
        z = jnp.dot(x_cat, wj_ref[...], preferred_element_type=f32)    # (N, 3J)
        y_j = (shift_down(z[:, 0:J]) + z[:, J:2 * J]
               + shift_up(z[:, 2 * J:3 * J]))                          # (N, J)

        # -- joint BN + ReLU --
        mu_j = jnp.mean(y_j, axis=0, keepdims=True)
        dj = y_j - mu_j
        var_j = jnp.mean(dj * dj, axis=0, keepdims=True)
        j_act = jnp.maximum(dj * jax.lax.rsqrt(var_j + BN_EPS), 0.0)

        # -- per-peak mean pool: 0/1 bf16 selection matmul, f32 scale after,
        #    then log2(1 + .) --
        cols = jax.lax.broadcasted_iota(jnp.int32, (R, N), 1)
        sel = (cols >= off_ref[...]) & (cols < off_ref[...] + len_ref[...])
        region = jnp.dot(sel.astype(jnp.bfloat16), j_act.astype(jnp.bfloat16),
                         preferred_element_type=f32) * scl_ref[...]
        out_ref[...] = jnp.log2(region + 1.0)
    return kernel


def fused_joint_forward(xp2, atac2, wa, wj, off_g, len_g, scl_g,
                        binary_atac, L25):
    N, D = xp2.shape
    A = wa.shape[1]
    J = wj.shape[1] // 3
    R = off_g.shape[0]
    # TODO(synk): tile over N-row blocks with two-pass BN (sum/sumsq scratch)
    # for production sizes on v7x (64 MiB VMEM) / 2-TC sharding; the fully
    # resident grid=(1,) form is correct and fits comfortably at these sizes.
    return pl.pallas_call(
        _make_joint_kernel(binary_atac, L25),
        out_shape=jax.ShapeDtypeStruct((R, J), jnp.float32),
        grid=(1,),
        in_specs=[pl.BlockSpec((N, D), lambda i: (0, 0)),
                  pl.BlockSpec((N, PATCH), lambda i: (0, 0)),
                  pl.BlockSpec((3, A), lambda i: (0, 0)),
                  pl.BlockSpec((D + A, 3 * J), lambda i: (0, 0)),
                  pl.BlockSpec((R, 1), lambda i: (0, 0)),
                  pl.BlockSpec((R, 1), lambda i: (0, 0)),
                  pl.BlockSpec((R, 1), lambda i: (0, 0))],
        out_specs=pl.BlockSpec((R, J), lambda i: (0, 0)),
        compiler_params=pltpu.CompilerParams(dimension_semantics=("arbitrary",)),
    )(xp2, atac2, wa, wj, off_g, len_g, scl_g)


# ------------------------------ host glue -----------------------------------
def build_segment_tables(splits, n_peaks, max_n_peaks, total_len):
    """Per-sample (offset, length, 1/length) of the kept peak chunks.

    Mirrors torch.split(...) + per-chunk mean + drop-trailing-chunk + zero-pad:
    sample i has n_peaks[i]+1 chunks, the first n_peaks[i] are kept."""
    B = len(n_peaks)
    off = np.zeros((B, max_n_peaks, 1), np.int32)
    ln = np.zeros((B, max_n_peaks, 1), np.int32)
    scl = np.zeros((B, max_n_peaks, 1), np.float32)
    ptr = 0
    for i in range(B):
        local = 0
        for p in range(int(n_peaks[i]) + 1):
            s = int(splits[ptr]); ptr += 1
            if p < int(n_peaks[i]):
                off[i, p, 0] = local
                ln[i, p, 0] = s
                scl[i, p, 0] = (1.0 / s) if s > 0 else 0.0
            local += s
        assert local == total_len, "per-sample split must sum to the sequence length"
    assert ptr == len(splits)
    return off, ln, scl


def pack_atac_weight(w_atac):
    # (A, 1, 3) -> (3, A): row k holds the tap-k weights across output channels.
    return jnp.transpose(w_atac[:, 0, :], (1, 0)).astype(jnp.float32)


def pack_joint_weight_3tap(w_joint):
    # (J, C, 3) -> (C, 3*J) bf16; column group k holds W[:, :, k].T, so the
    # kernel combines the three J-wide output groups with +-1 row shifts.
    blocks = [jnp.transpose(w_joint[:, :, k], (1, 0)) for k in range(3)]  # (C, J)
    return jnp.concatenate(blocks, axis=1).astype(jnp.bfloat16)


def _pick_block_batch(B, maxP):
    # largest divisor of B whose selection matrix keeps M = B_t*maxP near the
    # MXU height (and the (M, B_t*L) selection block small)
    cap = max(1, 256 // max(int(maxP), 1))
    bt = 1
    for d in range(1, B + 1):
        if B % d == 0 and d <= cap:
            bt = d
    return bt


def atac_split_pool_forward(x, atac, peak_split, n_peaks, max_n_peaks,
                            w_atac, w_joint, binary_atac=False, block_batch=None):
    """Pallas forward of ATACSplitPool (pool_method='mean', final_bn=False)."""
    B, L, D = x.shape
    L25 = L // PATCH
    maxP = int(max_n_peaks)
    J = w_joint.shape[0]

    B_t = block_batch if block_batch is not None else _pick_block_batch(B, maxP)
    assert B % B_t == 0
    G = B // B_t

    # tiny host-side segment tables (no dense (B, maxP, L) matrix anywhere)
    off_f, len_f, scl_f = build_segment_tables(peak_split, n_peaks, maxP, L)
    samp = (np.arange(B, dtype=np.int32) % B_t)[:, None]
    off_a = (off_f[:, :, 0] + samp * L).reshape(G, B_t * maxP, 1).astype(np.int32)
    len_a = len_f[:, :, 0].reshape(G, B_t * maxP, 1).astype(np.int32)
    scl_a = scl_f[:, :, 0].reshape(G, B_t * maxP, 1).astype(np.float32)

    patch_split = [int(s) // PATCH for s in peak_split]
    off_p, len_p, scl_p = build_segment_tables(patch_split, n_peaks, maxP, L25)
    off_g = (off_p[:, :, 0] + np.arange(B, dtype=np.int32)[:, None] * L25
             ).reshape(B * maxP, 1).astype(np.int32)
    len_g = len_p[:, :, 0].reshape(B * maxP, 1).astype(np.int32)
    scl_g = scl_p[:, :, 0].reshape(B * maxP, 1).astype(np.float32)

    # ---- kernel A: forward_x peak means + /25 max pool (x read from HBM once) ----
    xr_blk, xp_blk = x_region_and_pool(
        x, jnp.asarray(off_a), jnp.asarray(len_a), jnp.asarray(scl_a),
        B_t, L25, maxP)
    x_region = xr_blk.reshape(B, maxP, D)
    xp2 = xp_blk.reshape(B * L25, D)                         # bf16, free reshape

    # ---- kernel B: entire post-pool pipeline fused in one invocation ----
    atac2 = atac[:, :L25 * PATCH].reshape(B * L25, PATCH)    # free (contiguous)
    wa = pack_atac_weight(w_atac)
    wj = pack_joint_weight_3tap(w_joint)
    joint_flat = fused_joint_forward(
        xp2, atac2, wa, wj,
        jnp.asarray(off_g), jnp.asarray(len_g), jnp.asarray(scl_g),
        binary_atac, L25)
    joint_region = joint_flat.reshape(B, maxP, J)

    # TODO(synk): final_bn and BatchNorm running-statistics bookkeeping not emulated.
    return jnp.concatenate([x_region, joint_region], axis=2)  # (B, maxP, D+J)


# --------------------------- NumPy reference --------------------------------
def _conv1d_same_k3_np(x, w):
    B, Cin, L = x.shape
    xp = np.pad(x, ((0, 0), (0, 0), (1, 1)))
    y = np.zeros((B, w.shape[0], L), np.float32)
    for k in range(3):
        y += np.einsum('oc,bcl->bol', w[:, :, k], xp[:, :, k:k + L])
    return y


def _bn_relu_np(y):
    mean = y.mean(axis=(0, 2), keepdims=True)
    var = y.var(axis=(0, 2), keepdims=True)
    return np.maximum((y - mean) / np.sqrt(var + BN_EPS), 0.0)


def _split_pool_np(flat, splits, n_peaks, max_n_peaks):
    chunks, idx = [], 0
    for s in splits:
        c = flat[idx:idx + s]
        chunks.append(c.mean(0) if c.shape[0] > 0 else np.zeros(flat.shape[1], np.float32))
        idx += s
    chunks = np.stack(chunks)
    pool_idx = np.cumsum(np.asarray(n_peaks) + 1)
    starts = np.concatenate([[0], pool_idx[:-1]])
    ends = pool_idx - 1
    out = []
    for i in range(len(n_peaks)):
        sel = chunks[starts[i]:ends[i]]
        pad = np.zeros((max_n_peaks - int(n_peaks[i]), chunks.shape[1]), np.float32)
        out.append(np.concatenate([sel, pad], axis=0))
    return np.stack(out)


def reference_np(x, atac, peak_split, n_peaks, max_n_peaks, w_atac, w_joint):
    B, L, D = x.shape
    atac_t = np.log10(atac + 1.0)
    x_region = _split_pool_np(x.reshape(-1, D), peak_split, n_peaks, max_n_peaks)

    xc = np.transpose(x, (0, 2, 1))
    ac = atac_t[:, None, :]
    L25 = L // PATCH
    x_pool = xc[:, :, :L25 * PATCH].reshape(B, D, L25, PATCH).max(-1)
    a_pool = ac[:, :, :L25 * PATCH].reshape(B, 1, L25, PATCH).max(-1)
    a_act = _bn_relu_np(_conv1d_same_k3_np(a_pool, w_atac))
    j_act = _bn_relu_np(_conv1d_same_k3_np(np.concatenate([x_pool, a_act], 1), w_joint))
    j_t = np.transpose(j_act, (0, 2, 1))
    patch_split = [s // PATCH for s in peak_split]
    joint_region = _split_pool_np(j_t.reshape(-1, j_t.shape[-1]),
                                  patch_split, n_peaks, max_n_peaks)
    joint_region = np.log2(joint_region + 1.0)
    return np.concatenate([x_region, joint_region], axis=2)


# --------------------------------- main --------------------------------------
if __name__ == "__main__":
    B, L, D = 2, 200, 32          # batch, sequence length, motif_dim
    A, J = 8, 8                   # atac_kernel_num, joint_kernel_num
    max_n_peaks = 3
    n_peaks = [3, 2]
    # per-sample: n_peaks[i] peak chunks + 1 trailing chunk, each sums to L,
    # all multiples of the 25bp patch size.
    peak_split = [50, 75, 50, 25, 100, 50, 50]

    key = jax.random.PRNGKey(0)
    k1, k2, k3, k4 = jax.random.split(key, 4)
    x = jax.random.normal(k1, (B, L, D), jnp.float32)
    atac = jax.random.uniform(k2, (B, L), jnp.float32, minval=0.0, maxval=5.0)
    w_atac = jax.random.normal(k3, (A, 1, 3), jnp.float32) * 0.3       # Conv1d(1, A, 3)
    w_joint = jax.random.normal(k4, (J, D + A, 3), jnp.float32) * 0.1  # Conv1d(D+A, J, 3)

    out = atac_split_pool_forward(x, atac, peak_split, n_peaks, max_n_peaks,
                                  w_atac, w_joint)
    out = jax.block_until_ready(out)
    assert out.shape == (B, max_n_peaks, D + J)

    ref = reference_np(np.asarray(x), np.asarray(atac), peak_split, n_peaks,
                       max_n_peaks, np.asarray(w_atac), np.asarray(w_joint))
    np.testing.assert_allclose(np.asarray(out), ref, rtol=3e-2, atol=3e-2)
    print("KERNEL_OK")
</pallas_src>

<mosaic_0001>
module attributes {stable_mosaic.version = 11 : i64} {
  func.func @_x_region_and_pool_kernel(%arg0: i32, %arg1: memref<2x200x32xf32, #tpu.memory_space<vmem>>, %arg2: memref<1x6x1xi32, #tpu.memory_space<vmem>>, %arg3: memref<1x6x1xi32, #tpu.memory_space<vmem>>, %arg4: memref<1x6x1xf32, #tpu.memory_space<vmem>>, %arg5: memref<1x6x32xf32, #tpu.memory_space<vmem>>, %arg6: memref<1x16x32xbf16, #tpu.memory_space<vmem>>) attributes {dimension_semantics = [#tpu.dimension_semantics<parallel>], iteration_bounds = array<i64: 1>, scalar_prefetch = 0 : i64, scratch_operands = 0 : i64, tpu.core_type = #tpu.core_type<tc>, window_params = [{transform_indices = @transform_0, window_bounds = array<i64: 2, 200, 32>}, {transform_indices = @transform_1, window_bounds = array<i64: 1, 6, 1>}, {transform_indices = @transform_2, window_bounds = array<i64: 1, 6, 1>}, {transform_indices = @transform_3, window_bounds = array<i64: 1, 6, 1>}, {transform_indices = @transform_4, window_bounds = array<i64: 1, 6, 32>}, {transform_indices = @transform_5, window_bounds = array<i64: 1, 16, 32>}]} {
    %c0 = arith.constant 0 : index
    %c0_0 = arith.constant 0 : index
    %c0_1 = arith.constant 0 : index
    %0 = tpu.strided_load %arg1[%c0, %c0_0, %c0_1] {strides = array<i32: 1, 25, 1>} : memref<2x200x32xf32, #tpu.memory_space<vmem>>, vector<2x8x32xf32>
    %c0_2 = arith.constant 0 : index
    %c1 = arith.constant 1 : index
    %c0_3 = arith.constant 0 : index
    %1 = tpu.strided_load %arg1[%c0_2, %c1, %c0_3] {strides = array<i32: 1, 25, 1>} : memref<2x200x32xf32, #tpu.memory_space<vmem>>, vector<2x8x32xf32>
    %2 = arith.maximumf %0, %1 : vector<2x8x32xf32>
    %c0_4 = arith.constant 0 : index
    %c2 = arith.constant 2 : index
    %c0_5 = arith.constant 0 : index
    %3 = tpu.strided_load %arg1[%c0_4, %c2, %c0_5] {strides = array<i32: 1, 25, 1>} : memref<2x200x32xf32, #tpu.memory_space<vmem>>, vector<2x8x32xf32>
    %4 = arith.maximumf %2, %3 : vector<2x8x32xf32>
    %c0_6 = arith.constant 0 : index
    %c3 = arith.constant 3 : index
    %c0_7 = arith.constant 0 : index
    %5 = tpu.strided_load %arg1[%c0_6, %c3, %c0_7] {strides = array<i32: 1, 25, 1>} : memref<2x200x32xf32, #tpu.memory_space<vmem>>, vector<2x8x32xf32>
    %6 = arith.maximumf %4, %5 : vector<2x8x32xf32>
    %c0_8 = arith.constant 0 : index
    %c4 = arith.constant 4 : index
    %c0_9 = arith.constant 0 : index
    %7 = tpu.strided_load %arg1[%c0_8, %c4, %c0_9] {strides = array<i32: 1, 25, 1>} : memref<2x200x32xf32, #tpu.memory_space<vmem>>, vector<2x8x32xf32>
    %8 = arith.maximumf %6, %7 : vector<2x8x32xf32>
    %c0_10 = arith.constant 0 : index
    %c5 = arith.constant 5 : index
    %c0_11 = arith.constant 0 : index
    %9 = tpu.strided_load %arg1[%c0_10, %c5, %c0_11] {strides = array<i32: 1, 25, 1>} : memref<2x200x32xf32, #tpu.memory_space<vmem>>, vector<2x8x32xf32>
    %10 = arith.maximumf %8, %9 : vector<2x8x32xf32>
    %c0_12 = arith.constant 0 : index
    %c6 = arith.constant 6 : index
    %c0_13 = arith.constant 0 : index
    %11 = tpu.strided_load %arg1[%c0_12, %c6, %c0_13] {strides = array<i32: 1, 25, 1>} : memref<2x200x32xf32, #tpu.memory_space<vmem>>, vector<2x8x32xf32>
    %12 = arith.maximumf %10, %11 : vector<2x8x32xf32>
    %c0_14 = arith.constant 0 : index
    %c7 = arith.constant 7 : index
    %c0_15 = arith.constant 0 : index
    %13 = tpu.strided_load %arg1[%c0_14, %c7, %c0_15] {strides = array<i32: 1, 25, 1>} : memref<2x200x32xf32, #tpu.memory_space<vmem>>, vector<2x8x32xf32>
    %14 = arith.maximumf %12, %13 : vector<2x8x32xf32>
    %c0_16 = arith.constant 0 : index
    %c8 = arith.constant 8 : index
    %c0_17 = arith.constant 0 : index
    %15 = tpu.strided_load %arg1[%c0_16, %c8, %c0_17] {strides = array<i32: 1, 25, 1>} : memref<2x200x32xf32, #tpu.memory_space<vmem>>, vector<2x8x32xf32>
    %16 = arith.maximumf %14, %15 : vector<2x8x32xf32>
    %c0_18 = arith.constant 0 : index
    %c9 = arith.constant 9 : index
    %c0_19 = arith.constant 0 : index
    %17 = tpu.strided_load %arg1[%c0_18, %c9, %c0_19] {strides = array<i32: 1, 25, 1>} : memref<2x200x32xf32, #tpu.memory_space<vmem>>, vector<2x8x32xf32>
    %18 = arith.maximumf %16, %17 : vector<2x8x32xf32>
    %c0_20 = arith.constant 0 : index
    %c10 = arith.constant 10 : index
    %c0_21 = arith.constant 0 : index
    %19 = tpu.strided_load %arg1[%c0_20, %c10, %c0_21] {strides = array<i32: 1, 25, 1>} : memref<2x200x32xf32, #tpu.memory_space<vmem>>, vector<2x8x32xf32>
    %20 = arith.maximumf %18, %19 : vector<2x8x32xf32>
    %c0_22 = arith.constant 0 : index
    %c11 = arith.constant 11 : index
    %c0_23 = arith.constant 0 : index
    %21 = tpu.strided_load %arg1[%c0_22, %c11, %c0_23] {strides = array<i32: 1, 25, 1>} : memref<2x200x32xf32, #tpu.memory_space<vmem>>, vector<2x8x32xf32>
    %22 = arith.maximumf %20, %21 : vector<2x8x32xf32>
    %c0_24 = arith.constant 0 : index
    %c12 = arith.constant 12 : index
    %c0_25 = arith.constant 0 : index
    %23 = tpu.strided_load %arg1[%c0_24, %c12, %c0_25] {strides = array<i32: 1, 25, 1>} : memref<2x200x32xf32, #tpu.memory_space<vmem>>, vector<2x8x32xf32>
    %24 = arith.maximumf %22, %23 : vector<2x8x32xf32>
    %c0_26 = arith.constant 0 : index
    %c13 = arith.constant 13 : index
    %c0_27 = arith.constant 0 : index
    %25 = tpu.strided_load %arg1[%c0_26, %c13, %c0_27] {strides = array<i32: 1, 25, 1>} : memref<2x200x32xf32, #tpu.memory_space<vmem>>, vector<2x8x32xf32>
    %26 = arith.maximumf %24, %25 : vector<2x8x32xf32>
    %c0_28 = arith.constant 0 : index
    %c14 = arith.constant 14 : index
    %c0_29 = arith.constant 0 : index
    %27 = tpu.strided_load %arg1[%c0_28, %c14, %c0_29] {strides = array<i32: 1, 25, 1>} : memref<2x200x32xf32, #tpu.memory_space<vmem>>, vector<2x8x32xf32>
    %28 = arith.maximumf %26, %27 : vector<2x8x32xf32>
    %c0_30 = arith.constant 0 : index
    %c15 = arith.constant 15 : index
    %c0_31 = arith.constant 0 : index
    %29 = tpu.strided_load %arg1[%c0_30, %c15, %c0_31] {strides = array<i32: 1, 25, 1>} : memref<2x200x32xf32, #tpu.memory_space<vmem>>, vector<2x8x32xf32>
    %30 = arith.maximumf %28, %29 : vector<2x8x32xf32>
    %c0_32 = arith.constant 0 : index
    %c16 = arith.constant 16 : index
    %c0_33 = arith.constant 0 : index
    %31 = tpu.strided_load %arg1[%c0_32, %c16, %c0_33] {strides = array<i32: 1, 25, 1>} : memref<2x200x32xf32, #tpu.memory_space<vmem>>, vector<2x8x32xf32>
    %32 = arith.maximumf %30, %31 : vector<2x8x32xf32>
    %c0_34 = arith.constant 0 : index
    %c17 = arith.constant 17 : index
    %c0_35 = arith.constant 0 : index
    %33 = tpu.strided_load %arg1[%c0_34, %c17, %c0_35] {strides = array<i32: 1, 25, 1>} : memref<2x200x32xf32, #tpu.memory_space<vmem>>, vector<2x8x32xf32>
    %34 = arith.maximumf %32, %33 : vector<2x8x32xf32>
    %c0_36 = arith.constant 0 : index
    %c18 = arith.constant 18 : index
    %c0_37 = arith.constant 0 : index
    %35 = tpu.strided_load %arg1[%c0_36, %c18, %c0_37] {strides = array<i32: 1, 25, 1>} : memref<2x200x32xf32, #tpu.memory_space<vmem>>, vector<2x8x32xf32>
    %36 = arith.maximumf %34, %35 : vector<2x8x32xf32>
    %c0_38 = arith.constant 0 : index
    %c19 = arith.constant 19 : index
    %c0_39 = arith.constant 0 : index
    %37 = tpu.strided_load %arg1[%c0_38, %c19, %c0_39] {strides = array<i32: 1, 25, 1>} : memref<2x200x32xf32, #tpu.memory_space<vmem>>, vector<2x8x32xf32>
    %38 = arith.maximumf %36, %37 : vector<2x8x32xf32>
    %c0_40 = arith.constant 0 : index
    %c20 = arith.constant 20 : index
    %c0_41 = arith.constant 0 : index
    %39 = tpu.strided_load %arg1[%c0_40, %c20, %c0_41] {strides = array<i32: 1, 25, 1>} : memref<2x200x32xf32, #tpu.memory_space<vmem>>, vector<2x8x32xf32>
    %40 = arith.maximumf %38, %39 : vector<2x8x32xf32>
    %c0_42 = arith.constant 0 : index
    %c21 = arith.constant 21 : index
    %c0_43 = arith.constant 0 : index
    %41 = tpu.strided_load %arg1[%c0_42, %c21, %c0_43] {strides = array<i32: 1, 25, 1>} : memref<2x200x32xf32, #tpu.memory_space<vmem>>, vector<2x8x32xf32>
    %42 = arith.maximumf %40, %41 : vector<2x8x32xf32>
    %c0_44 = arith.constant 0 : index
    %c22 = arith.constant 22 : index
    %c0_45 = arith.constant 0 : index
    %43 = tpu.strided_load %arg1[%c0_44, %c22, %c0_45] {strides = array<i32: 1, 25, 1>} : memref<2x200x32xf32, #tpu.memory_space<vmem>>, vector<2x8x32xf32>
    %44 = arith.maximumf %42, %43 : vector<2x8x32xf32>
    %c0_46 = arith.constant 0 : index
    %c23 = arith.constant 23 : index
    %c0_47 = arith.constant 0 : index
    %45 = tpu.strided_load %arg1[%c0_46, %c23, %c0_47] {strides = array<i32: 1, 25, 1>} : memref<2x200x32xf32, #tpu.memory_space<vmem>>, vector<2x8x32xf32>
    %46 = arith.maximumf %44, %45 : vector<2x8x32xf32>
    %c0_48 = arith.constant 0 : index
    %c24 = arith.constant 24 : index
    %c0_49 = arith.constant 0 : index
    %47 = tpu.strided_load %arg1[%c0_48, %c24, %c0_49] {strides = array<i32: 1, 25, 1>} : memref<2x200x32xf32, #tpu.memory_space<vmem>>, vector<2x8x32xf32>
    %48 = arith.maximumf %46, %47 : vector<2x8x32xf32>
    %49 = vector.shape_cast %48 : vector<2x8x32xf32> to vector<16x32xf32>
    %50 = arith.truncf %49 : vector<16x32xf32> to vector<16x32xbf16>
    %c0_50 = arith.constant 0 : index
    %c0_51 = arith.constant 0 : index
    %c0_52 = arith.constant 0 : index
    %51 = vector.load %arg6[%c0_50, %c0_51, %c0_52] : memref<1x16x32xbf16, #tpu.memory_space<vmem>>, vector<1x16x32xbf16>
    %52 = vector.shape_cast %51 : vector<1x16x32xbf16> to vector<16x32xbf16>
    %53 = vector.shape_cast %50 : vector<16x32xbf16> to vector<1x16x32xbf16>
    tpu.vector_store %arg6[%c0_50, %c0_51, %c0_52], %53 {strides = array<i32>} : memref<1x16x32xbf16, #tpu.memory_space<vmem>>, vector<1x16x32xbf16>,
    %c0_53 = arith.constant 0 : index
    %c0_54 = arith.constant 0 : index
    %c0_55 = arith.constant 0 : index
    %54 = vector.load %arg1[%c0_53, %c0_54, %c0_55] : memref<2x200x32xf32, #tpu.memory_space<vmem>>, vector<2x200x32xf32>
    %55 = vector.shape_cast %54 : vector<2x200x32xf32> to vector<400x32xf32>
    %56 = arith.truncf %55 : vector<400x32xf32> to vector<400x32xbf16>
    %57 = tpu.iota {dimensions = array<i32: 1>} : vector<6x400xi32>
    %c0_56 = arith.constant 0 : index
    %c0_57 = arith.constant 0 : index
    %c0_58 = arith.constant 0 : index
    %58 = vector.load %arg2[%c0_56, %c0_57, %c0_58] : memref<1x6x1xi32, #tpu.memory_space<vmem>>, vector<1x6x1xi32>
    %59 = vector.shape_cast %58 : vector<1x6x1xi32> to vector<6x1xi32>
    %60 = vector.broadcast %59 : vector<6x1xi32> to vector<6x400xi32>
    %61 = arith.cmpi sge, %57, %60 : vector<6x400xi32>
    %c0_59 = arith.constant 0 : index
    %c0_60 = arith.constant 0 : index
    %c0_61 = arith.constant 0 : index
    %62 = vector.load %arg3[%c0_59, %c0_60, %c0_61] : memref<1x6x1xi32, #tpu.memory_space<vmem>>, vector<1x6x1xi32>
    %63 = vector.shape_cast %62 : vector<1x6x1xi32> to vector<6x1xi32>
    %64 = arith.addi %59, %63 : vector<6x1xi32>
    %65 = vector.broadcast %64 : vector<6x1xi32> to vector<6x400xi32>
    %66 = arith.cmpi slt, %57, %65 : vector<6x400xi32>
    %67 = arith.andi %61, %66 : vector<6x400xi1>
    %68 = arith.extui %67 : vector<6x400xi1> to vector<6x400xi32>
    %69 = arith.sitofp %68 : vector<6x400xi32> to vector<6x400xf32>
    %70 = arith.truncf %69 : vector<6x400xf32> to vector<6x400xbf16>
    %cst = arith.constant dense<0.000000e+00> : vector<6x32xf32>
    %71 = tpu.matmul %70, %56, %cst {dimension_numbers = #tpu.dot_dimension_numbers<[1], [0], [0], [1], [0, 0, 1, 1], [], []>} : vector<6x400xbf16>, vector<400x32xbf16>, vector<6x32xf32> -> vector<6x32xf32>
    %c0_62 = arith.constant 0 : index
    %c0_63 = arith.constant 0 : index
    %c0_64 = arith.constant 0 : index
    %72 = vector.load %arg4[%c0_62, %c0_63, %c0_64] : memref<1x6x1xf32, #tpu.memory_space<vmem>>, vector<1x6x1xf32>
    %73 = vector.shape_cast %72 : vector<1x6x1xf32> to vector<6x1xf32>
    %74 = vector.broadcast %73 : vector<6x1xf32> to vector<6x32xf32>
    %75 = arith.mulf %71, %74 : vector<6x32xf32>
    %c0_65 = arith.constant 0 : index
    %c0_66 = arith.constant 0 : index
    %c0_67 = arith.constant 0 : index
    %76 = vector.load %arg5[%c0_65, %c0_66, %c0_67] : memref<1x6x32xf32, #tpu.memory_space<vmem>>, vector<1x6x32xf32>
    %77 = vector.shape_cast %76 : vector<1x6x32xf32> to vector<6x32xf32>
    %78 = vector.shape_cast %75 : vector<6x32xf32> to vector<1x6x32xf32>
    tpu.vector_store %arg5[%c0_65, %c0_66, %c0_67], %78 {strides = array<i32>} : memref<1x6x32xf32, #tpu.memory_space<vmem>>, vector<1x6x32xf32>,
    return
  }
  func.func @transform_0(%arg0: i32) -> (i32, i32, i32) {
    %c0_i32 = arith.constant 0 : i32
    %c0_i32_0 = arith.constant 0 : i32
    %c0_i32_1 = arith.constant 0 : i32
    return %arg0, %c0_i32, %c0_i32_0 : i32, i32, i32
  }
  func.func @transform_1(%arg0: i32) -> (i32, i32, i32) {
    %c0_i32 = arith.constant 0 : i32
    %c0_i32_0 = arith.constant 0 : i32
    %c0_i32_1 = arith.constant 0 : i32
    return %arg0, %c0_i32, %c0_i32_0 : i32, i32, i32
  }
  func.func @transform_2(%arg0: i32) -> (i32, i32, i32) {
    %c0_i32 = arith.constant 0 : i32
    %c0_i32_0 = arith.constant 0 : i32
    %c0_i32_1 = arith.constant 0 : i32
    return %arg0, %c0_i32, %c0_i32_0 : i32, i32, i32
  }
  func.func @transform_3(%arg0: i32) -> (i32, i32, i32) {
    %c0_i32 = arith.constant 0 : i32
    %c0_i32_0 = arith.constant 0 : i32
    %c0_i32_1 = arith.constant 0 : i32
    return %arg0, %c0_i32, %c0_i32_0 : i32, i32, i32
  }
  func.func @transform_4(%arg0: i32) -> (i32, i32, i32) {
    %c0_i32 = arith.constant 0 : i32
    %c0_i32_0 = arith.constant 0 : i32
    %c0_i32_1 = arith.constant 0 : i32
    return %arg0, %c0_i32, %c0_i32_0 : i32, i32, i32
  }
  func.func @transform_5(%arg0: i32) -> (i32, i32, i32) {
    %c0_i32 = arith.constant 0 : i32
    %c0_i32_0 = arith.constant 0 : i32
    %c0_i32_1 = arith.constant 0 : i32
    return %arg0, %c0_i32, %c0_i32_0 : i32, i32, i32
  }
}

</mosaic_0001>

<llo_original>
// kernel: tpu_custom_call.1
$region0: #{tpu_custom_call.1}
  #allocation0 [shape = 'u32[]', space=smem, size = 0x4, offset = 0x4, fixed_abs, tag = 'smem constant byte address 0x4 - core index']
  #allocation1 [shape = 'u32[144,128]{1,0:T(1,128)}', space=vmem, size = 0x12000, scoped, tag = 'internal scratch']
  %s0 = inlined_call_operand.vmem [shape: f32[2,200,32], index: 0, kind: input, shape index: {}]
  %s1 = inlined_call_operand.vmem [shape: s32[1,6,1], index: 1, kind: input, shape index: {}]
  %s2 = inlined_call_operand.vmem [shape: s32[1,6,1], index: 2, kind: input, shape index: {}]
  %s3 = inlined_call_operand.vmem [shape: f32[1,6,1], index: 3, kind: input, shape index: {}]
  %s4 = inlined_call_operand.vmem [shape: f32[1,6,32], index: 4, kind: output, shape index: {0}]
  %s5 = inlined_call_operand.hbm [shape: bf16[1,16,32], index: 5, kind: output, shape index: {1}]
  %6 = xla_tuple %s4, %s5
  %s7 = sld [smem:[#allocation0]]
  $region34: #{tpu_custom_call.1} parent=0
    _
  %s9 = ssub.s32 1, %s7
  %s10 = scalar_select 0, %s9, %s7
  $region1: #{tpu_custom_call.1} parent=0
    #allocation2 [shape = 'u8[4096]{0}', space=vmem, size = 0x1000, scoped, tag = 'output window, operand 1, single buffered']
    #allocation3 [shape = 's32[1]{0}', space=sflag, size = 0x4, scoped, tag = 'scoped memory for tpu_custom_call.1']
    %11 = vsyncpa [#allocation3], 0
    // Predicated region
    $region2: #{tpu_custom_call.1} parent=1 // pred_check
      _
    $region3: #{tpu_custom_call.1} parent=1 // pred_check_branch
      %13 = sbr.rel (0) target = $region5
    $region4: #{tpu_custom_call.1} parent=1 // pred_region
      _
    $region5: #{tpu_custom_call.1} parent=1 // pred_fallthru
      _
    // Predicated region
    $region6: #{tpu_custom_call.1} parent=1 // pred_check
      _
    $region7: #{tpu_custom_call.1} parent=1 // pred_check_branch
      %15 = sbr.rel (0) target = $region9
    $region8: #{tpu_custom_call.1} parent=1 // pred_region
      _
    $region9: #{tpu_custom_call.1} parent=1 // pred_fallthru
      _
    // Predicated region
    $region10: #{tpu_custom_call.1} parent=1 // pred_check
      _
    $region11: #{tpu_custom_call.1} parent=1 // pred_check_branch
      %17 = sbr.rel (0) target = $region13
    $region12: #{tpu_custom_call.1} parent=1 // pred_region
      _
    $region13: #{tpu_custom_call.1} parent=1 // pred_fallthru
      _
    // Predicated region
    $region14: #{tpu_custom_call.1} parent=1 // pred_check
      _
    $region15: #{tpu_custom_call.1} parent=1 // pred_check_branch
      %19 = sbr.rel (0) target = $region17
    $region16: #{tpu_custom_call.1} parent=1 // pred_region
      _
    $region17: #{tpu_custom_call.1} parent=1 // pred_fallthru
      _
    %v21 = vld [vmem:[%s0] ss:$25 sm:$0xff]
    %s22 = scalar_lea.vmem %s0, 200
    %v23 = vld [vmem:[%s22] ss:$25 sm:$0xff]
    %s24 = scalar_lea.vmem %s0, 1
    %v25 = vld [vmem:[%s24] ss:$25 sm:$0xff]
    %s26 = scalar_lea.vmem %s0, 201
    %v27 = vld [vmem:[%s26] ss:$25 sm:$0xff]
    %v28 = vmax.f32 %v21, %v25
    %v29 = vmax.f32 %v23, %v27
    %s30 = scalar_lea.vmem %s0, 2
    %v31 = vld [vmem:[%s30] ss:$25 sm:$0xff]
    %s32 = scalar_lea.vmem %s0, 202
    %v33 = vld [vmem:[%s32] ss:$25 sm:$0xff]
    %v34 = vmax.f32 %v28, %v31
    %v35 = vmax.f32 %v29, %v33
    %s36 = scalar_lea.vmem %s0, 3
    %v37 = vld [vmem:[%s36] ss:$25 sm:$0xff]
    %s38 = scalar_lea.vmem %s0, 203
    %v39 = vld [vmem:[%s38] ss:$25 sm:$0xff]
    %v40 = vmax.f32 %v34, %v37
    %v41 = vmax.f32 %v35, %v39
    %s42 = scalar_lea.vmem %s0, 4
    %v43 = vld [vmem:[%s42] ss:$25 sm:$0xff]
    %s44 = scalar_lea.vmem %s0, 204
    %v45 = vld [vmem:[%s44] ss:$25 sm:$0xff]
    %v46 = vmax.f32 %v40, %v43
    %v47 = vmax.f32 %v41, %v45
    %s48 = scalar_lea.vmem %s0, 5
    %v49 = vld [vmem:[%s48] ss:$25 sm:$0xff]
    %s50 = scalar_lea.vmem %s0, 205
    %v51 = vld [vmem:[%s50] ss:$25 sm:$0xff]
    %v52 = vmax.f32 %v46, %v49
    %v53 = vmax.f32 %v47, %v51
    %s54 = scalar_lea.vmem %s0, 6
    %v55 = vld [vmem:[%s54] ss:$25 sm:$0xff]
    %s56 = scalar_lea.vmem %s0, 206
    %v57 = vld [vmem:[%s56] ss:$25 sm:$0xff]
    %v58 = vmax.f32 %v52, %v55
    %v59 = vmax.f32 %v53, %v57
    %s60 = scalar_lea.vmem %s0, 7
    %v61 = vld [vmem:[%s60] ss:$25 sm:$0xff]
    %s62 = scalar_lea.vmem %s0, 207
    %v63 = vld [vmem:[%s62] ss:$25 sm:$0xff]
    %v64 = vmax.f32 %v58, %v61
    %v65 = vmax.f32 %v59, %v63
    %s66 = scalar_lea.vmem %s0, 8
    %v67 = vld [vmem:[%s66] ss:$25 sm:$0xff]
    %s68 = scalar_lea.vmem %s0, 208
    %v69 = vld [vmem:[%s68] ss:$25 sm:$0xff]
    %v70 = vmax.f32 %v64, %v67
    %v71 = vmax.f32 %v65, %v69
    %s72 = scalar_lea.vmem %s0, 9
    %v73 = vld [vmem:[%s72] ss:$25 sm:$0xff]
    %s74 = scalar_lea.vmem %s0, 209
    %v75 = vld [vmem:[%s74] ss:$25 sm:$0xff]
    %v76 = vmax.f32 %v70, %v73
    %v77 = vmax.f32 %v71, %v75
    %s78 = scalar_lea.vmem %s0, 10
    %v79 = vld [vmem:[%s78] ss:$25 sm:$0xff]
    %s80 = scalar_lea.vmem %s0, 210
    %v81 = vld [vmem:[%s80] ss:$25 sm:$0xff]
    %v82 = vmax.f32 %v76, %v79
    %v83 = vmax.f32 %v77, %v81
    %s84 = scalar_lea.vmem %s0, 11
    %v85 = vld [vmem:[%s84] ss:$25 sm:$0xff]
    %s86 = scalar_lea.vmem %s0, 211
    %v87 = vld [vmem:[%s86] ss:$25 sm:$0xff]
    %v88 = vmax.f32 %v82, %v85
    %v89 = vmax.f32 %v83, %v87
    %s90 = scalar_lea.vmem %s0, 12
    %v91 = vld [vmem:[%s90] ss:$25 sm:$0xff]
    %s92 = scalar_lea.vmem %s0, 212
    %v93 = vld [vmem:[%s92] ss:$25 sm:$0xff]
    %v94 = vmax.f32 %v88, %v91
    %v95 = vmax.f32 %v89, %v93
    %s96 = scalar_lea.vmem %s0, 13
    %v97 = vld [vmem:[%s96] ss:$25 sm:$0xff]
    %s98 = scalar_lea.vmem %s0, 213
    %v99 = vld [vmem:[%s98] ss:$25 sm:$0xff]
    %v100 = vmax.f32 %v94, %v97
    %v101 = vmax.f32 %v95, %v99
    %s102 = scalar_lea.vmem %s0, 14
    %v103 = vld [vmem:[%s102] ss:$25 sm:$0xff]
    %s104 = scalar_lea.vmem %s0, 214
    %v105 = vld [vmem:[%s104] ss:$25 sm:$0xff]
    %v106 = vmax.f32 %v100, %v103
    %v107 = vmax.f32 %v101, %v105
    %s108 = scalar_lea.vmem %s0, 15
    %v109 = vld [vmem:[%s108] ss:$25 sm:$0xff]
    %s110 = scalar_lea.vmem %s0, 215
    %v111 = vld [vmem:[%s110] ss:$25 sm:$0xff]
    %v112 = vmax.f32 %v106, %v109
    %v113 = vmax.f32 %v107, %v111
    %s114 = scalar_lea.vmem %s0, 16
    %v115 = vld [vmem:[%s114] ss:$25 sm:$0xff]
    %s116 = scalar_lea.vmem %s0, 216
    %v117 = vld [vmem:[%s116] ss:$25 sm:$0xff]
    %v118 = vmax.f32 %v112, %v115
    %v119 = vmax.f32 %v113, %v117
    %s120 = scalar_lea.vmem %s0, 17
    %v121 = vld [vmem:[%s120] ss:$25 sm:$0xff]
    %s122 = scalar_lea.vmem %s0, 217
    %v123 = vld [vmem:[%s122] ss:$25 sm:$0xff]
    %v124 = vmax.f32 %v118, %v121
    %v125 = vmax.f32 %v119, %v123
    %s126 = scalar_lea.vmem %s0, 18
    %v127 = vld [vmem:[%s126] ss:$25 sm:$0xff]
    %s128 = scalar_lea.vmem %s0, 218
    %v129 = vld [vmem:[%s128] ss:$25 sm:$0xff]
    %v130 = vmax.f32 %v124, %v127
    %v131 = vmax.f32 %v125, %v129
    %s132 = scalar_lea.vmem %s0, 19
    %v133 = vld [vmem:[%s132] ss:$25 sm:$0xff]
    %s134 = scalar_lea.vmem %s0, 219
    %v135 = vld [vmem:[%s134] ss:$25 sm:$0xff]
    %v136 = vmax.f32 %v130, %v133
    %v137 = vmax.f32 %v131, %v135
    %s138 = scalar_lea.vmem %s0, 20
    %v139 = vld [vmem:[%s138] ss:$25 sm:$0xff]
    %s140 = scalar_lea.vmem %s0, 220
    %v141 = vld [vmem:[%s140] ss:$25 sm:$0xff]
    %v142 = vmax.f32 %v136, %v139
    %v143 = vmax.f32 %v137, %v141
    %s144 = scalar_lea.vmem %s0, 21
    %v145 = vld [vmem:[%s144] ss:$25 sm:$0xff]
    %s146 = scalar_lea.vmem %s0, 221
    %v147 = vld [vmem:[%s146] ss:$25 sm:$0xff]
    %v148 = vmax.f32 %v142, %v145
    %v149 = vmax.f32 %v143, %v147
    %s150 = scalar_lea.vmem %s0, 22
    %v151 = vld [vmem:[%s150] ss:$25 sm:$0xff]
    %s152 = scalar_lea.vmem %s0, 222
    %v153 = vld [vmem:[%s152] ss:$25 sm:$0xff]
    %v154 = vmax.f32 %v148, %v151
    %v155 = vmax.f32 %v149, %v153
    %s156 = scalar_lea.vmem %s0, 23
    %v157 = vld [vmem:[%s156] ss:$25 sm:$0xff]
    %s158 = scalar_lea.vmem %s0, 223
    %v159 = vld [vmem:[%s158] ss:$25 sm:$0xff]
    %v160 = vmax.f32 %v154, %v157
    %v161 = vmax.f32 %v155, %v159
    %s162 = scalar_lea.vmem %s0, 24
    %v163 = vld [vmem:[%s162] ss:$25 sm:$0xff]
    %s164 = scalar_lea.vmem %s0, 224
    %v165 = vld [vmem:[%s164] ss:$25 sm:$0xff]
    %v166 = vmax.f32 %v160, %v163
    %v167 = vmax.f32 %v161, %v165
    %v168 = vpack.c.bf16 %v167, %v166
    %v170 = vunpack.c.l.b16 %v168
    %v171 = vunpack.c.h.b16 %v168
    %v172 = vpack.c.b16 %v170, %v170
    %v173 = vpack.c.b16 %v171, %v171
    %vm176 = vcmask 257024
    %177 = vst.msk [vmem:[#allocation2] sm:$0xf] %vm176, %v172
    %178 = vst.msk [vmem:[#allocation2 + $0x4] sm:$0xf] %vm176, %v173
    %v179 = vld [vmem:[%s0] sm:$0xff]
    %v180 = vld [vmem:[%s0 + $0x8] sm:$0xff]
    %v181 = vld [vmem:[%s0 + $0x10] sm:$0xff]
    %v182 = vld [vmem:[%s0 + $0x18] sm:$0xff]
    %v183 = vld [vmem:[%s0 + $0x20] sm:$0xff]
    %v184 = vld [vmem:[%s0 + $0x28] sm:$0xff]
    %v185 = vld [vmem:[%s0 + $0x30] sm:$0xff]
    %v186 = vld [vmem:[%s0 + $0x38] sm:$0xff]
    %v187 = vld [vmem:[%s0 + $0x40] sm:$0xff]
    %v188 = vld [vmem:[%s0 + $0x48] sm:$0xff]
    %v189 = vld [vmem:[%s0 + $0x50] sm:$0xff]
    %v190 = vld [vmem:[%s0 + $0x58] sm:$0xff]
    %v191 = vld [vmem:[%s0 + $0x60] sm:$0xff]
    %v192 = vld [vmem:[%s0 + $0x68] sm:$0xff]
    %v193 = vld [vmem:[%s0 + $0x70] sm:$0xff]
    %v194 = vld [vmem:[%s0 + $0x78] sm:$0xff]
    %v195 = vld [vmem:[%s0 + $0x80] sm:$0xff]
    %v196 = vld [vmem:[%s0 + $0x88] sm:$0xff]
    %v197 = vld [vmem:[%s0 + $0x90] sm:$0xff]
    %v198 = vld [vmem:[%s0 + $0x98] sm:$0xff]
    %v199 = vld [vmem:[%s0 + $0xa0] sm:$0xff]
    %v200 = vld [vmem:[%s0 + $0xa8] sm:$0xff]
    %v201 = vld [vmem:[%s0 + $0xb0] sm:$0xff]
    %v202 = vld [vmem:[%s0 + $0xb8] sm:$0xff]
    %v203 = vld [vmem:[%s0 + $0xc0] sm:$0xff]
    %v204 = vld [vmem:[%s0 + $0xc8] sm:$0xff]
    %v205 = vld [vmem:[%s0 + $0xd0] sm:$0xff]
    %v206 = vld [vmem:[%s0 + $0xd8] sm:$0xff]
    %v207 = vld [vmem:[%s0 + $0xe0] sm:$0xff]
    %v208 = vld [vmem:[%s0 + $0xe8] sm:$0xff]
    %v209 = vld [vmem:[%s0 + $0xf0] sm:$0xff]
    %v210 = vld [vmem:[%s0 + $0xf8] sm:$0xff]
    %v211 = vld [vmem:[%s0 + $0x100] sm:$0xff]
    %v212 = vld [vmem:[%s0 + $0x108] sm:$0xff]
    %v213 = vld [vmem:[%s0 + $0x110] sm:$0xff]
    %v214 = vld [vmem:[%s0 + $0x118] sm:$0xff]
    %v215 = vld [vmem:[%s0 + $0x120] sm:$0xff]
    %v216 = vld [vmem:[%s0 + $0x128] sm:$0xff]
    %v217 = vld [vmem:[%s0 + $0x130] sm:$0xff]
    %v218 = vld [vmem:[%s0 + $0x138] sm:$0xff]
    %v219 = vld [vmem:[%s0 + $0x140] sm:$0xff]
    %v220 = vld [vmem:[%s0 + $0x148] sm:$0xff]
    %v221 = vld [vmem:[%s0 + $0x150] sm:$0xff]
    %v222 = vld [vmem:[%s0 + $0x158] sm:$0xff]
    %v223 = vld [vmem:[%s0 + $0x160] sm:$0xff]
    %v224 = vld [vmem:[%s0 + $0x168] sm:$0xff]
    %v225 = vld [vmem:[%s0 + $0x170] sm:$0xff]
    %v226 = vld [vmem:[%s0 + $0x178] sm:$0xff]
    %v227 = vld [vmem:[%s0 + $0x180] sm:$0xff]
    %v228 = vld [vmem:[%s0 + $0x188] sm:$0xff]
    %v229 = vpack.c.bf16 %v180, %v179
    %v230 = vpack.c.bf16 %v182, %v181
    %v231 = vpack.c.bf16 %v184, %v183
    %v232 = vpack.c.bf16 %v186, %v185
    %v233 = vpack.c.bf16 %v188, %v187
    %v234 = vpack.c.bf16 %v190, %v189
    %v235 = vpack.c.bf16 %v192, %v191
    %v236 = vpack.c.bf16 %v194, %v193
    %v237 = vpack.c.bf16 %v196, %v195
    %v238 = vpack.c.bf16 %v198, %v197
    %v239 = vpack.c.bf16 %v200, %v199
    %v240 = vpack.c.bf16 %v202, %v201
    %v241 = vpack.c.bf16 %v204, %v203
    %v242 = vpack.c.bf16 %v206, %v205
    %v243 = vpack.c.bf16 %v208, %v207
    %v244 = vpack.c.bf16 %v210, %v209
    %v245 = vpack.c.bf16 %v212, %v211
    %v246 = vpack.c.bf16 %v214, %v213
    %v247 = vpack.c.bf16 %v216, %v215
    %v248 = vpack.c.bf16 %v218, %v217
    %v249 = vpack.c.bf16 %v220, %v219
    %v250 = vpack.c.bf16 %v222, %v221
    %v251 = vpack.c.bf16 %v224, %v223
    %v252 = vpack.c.bf16 %v226, %v225
    %v253 = vpack.c.bf16 %v228, %v227
    %v254 = vlaneseq
    %v255 = vand.u32 %v254, 127
    %v256 = vadd.s32 %v255, 128
    %v257 = vadd.s32 %v255, 256
    %v258 = vadd.s32 %v255, 384
    %v259 = vld [vmem:[%s1] sm:$0x3f]
    %260 = vset.pattern.permute.xlu0 0
    %261 = vperm.xlu0 %260, %v259
    %v262 = vpop.permute.xlu0 %261
    %vm263 = vcmp.ge.s32.totalorder %v255, %v262
    %vm264 = vcmp.ge.s32.totalorder %v256, %v262
    %vm265 = vcmp.ge.s32.totalorder %v257, %v262
    %vm266 = vcmp.ge.s32.totalorder %v258, %v262
    %v267 = vld [vmem:[%s2] sm:$0x3f]
    %v268 = vadd.s32 %v259, %v267
    %269 = vset.pattern.permute.xlu0 0
    %270 = vperm.xlu0 %269, %v268
    %v271 = vpop.permute.xlu0 %270
    %vm272 = vcmp.lt.s32.totalorder %v255, %v271
    %vm273 = vcmp.lt.s32.totalorder %v256, %v271
    %vm274 = vcmp.lt.s32.totalorder %v257, %v271
    %vm275 = vcmp.lt.s32.totalorder %v258, %v271
    %vm276 = vmand %vm263, %vm272
    %vm277 = vmand %vm264, %vm273
    %vm278 = vmand %vm265, %vm274
    %vm279 = vmand %vm266, %vm275
    %v280 = vsel %vm276, 1, 0
    %v281 = vsel %vm277, 1, 0
    %v282 = vsel %vm278, 1, 0
    %v283 = vsel %vm279, 1, 0
    %v284 = vcvt.s32.f32 %v280
    %v285 = vcvt.s32.f32 %v281
    %v286 = vcvt.s32.f32 %v282
    %v287 = vcvt.s32.f32 %v283
    %v288 = vpack.c.bf16 %v284, %v284
    %v289 = vpack.c.bf16 %v285, %v285
    %v290 = vpack.c.bf16 %v286, %v286
    %v291 = vpack.c.bf16 %v287, %v287
    %vm292 = vcmask 130048
    %v294 = vsel %vm292, %v291, 0
    %296 = vmatprep.subr.bf16.mxu0 0
    %297 = vmatpush1.bf16.msra.mxu0 %v229
    %298 = vmatprep.subr.bf16.mxu0 0
    %299 = vmatpush1.bf16.msra.mxu0 %v230
    %300 = vmatprep.subr.bf16.mxu0 0
    %301 = vmatpush1.bf16.msra.mxu0 %v231
    %302 = vmatprep.subr.bf16.mxu0 0
    %303 = vmatpush1.bf16.msra.mxu0 %v232
    %304 = vmatprep.subr.bf16.mxu0 0
    %305 = vmatpush1.bf16.msra.mxu0 %v233
    %306 = vmatprep.subr.bf16.mxu0 0
    %307 = vmatpush1.bf16.msra.mxu0 %v234
    %308 = vmatprep.subr.bf16.mxu0 0
    %309 = vmatpush1.bf16.msra.mxu0 %v235
    %310 = vmatprep.subr.bf16.mxu0 0
    %311 = vmatpush1.bf16.msra.mxu0 %v236
    %312 = vmatprep.subr.bf16.mxu0 0
    %313 = vmatpush1.bf16.msra.mxu0 %v237
    %314 = vmatprep.subr.bf16.mxu0 0
    %315 = vmatpush1.bf16.msra.mxu0 %v238
    %316 = vmatprep.subr.bf16.mxu0 0
    %317 = vmatpush1.bf16.msra.mxu0 %v239
    %318 = vmatprep.subr.bf16.mxu0 0
    %319 = vmatpush1.bf16.msra.mxu0 %v240
    %320 = vmatprep.subr.bf16.mxu0 0
    %321 = vmatpush1.bf16.msra.mxu0 %v241
    %322 = vmatprep.subr.bf16.mxu0 0
    %323 = vmatpush1.bf16.msra.mxu0 %v242
    %324 = vmatprep.subr.bf16.mxu0 0
    %325 = vmatpush1.bf16.msra.mxu0 %v243
    %326 = vmatprep.subr.bf16.mxu0 0
    %327 = vmatpush1.bf16.msra.mxu0 %v244
    %328 = vmatprep.mubr.bf16.mxu0 %v289
    %329 = vmatmul.mubr.bf16.gmra.mrb[0].mxu0 %v288
    %v330 = vpop.f32.mrb[0].mxu0
    %v331 = vadd.f32 0.0, %v330
    %v332 = vpop.f32.mrb[0].mxu0
    %v333 = vpop.f32.mrb[0].mxu0
    %v334 = vpop.f32.mrb[0].mxu0
    %335 = vdwg.mxu0
    %336 = vmatprep.subr.bf16.mxu0 0
    %337 = vmatpush1.bf16.msra.mxu0 %v245
    %338 = vmatprep.subr.bf16.mxu0 0
    %339 = vmatpush1.bf16.msra.mxu0 %v246
    %340 = vmatprep.subr.bf16.mxu0 0
    %341 = vmatpush1.bf16.msra.mxu0 %v247
    %342 = vmatprep.subr.bf16.mxu0 0
    %343 = vmatpush1.bf16.msra.mxu0 %v248
    %344 = vmatprep.subr.bf16.mxu0 0
    %345 = vmatpush1.bf16.msra.mxu0 %v249
    %346 = vmatprep.subr.bf16.mxu0 0
    %347 = vmatpush1.bf16.msra.mxu0 %v250
    %348 = vmatprep.subr.bf16.mxu0 0
    %349 = vmatpush1.bf16.msra.mxu0 %v251
    %350 = vmatprep.subr.bf16.mxu0 0
    %351 = vmatpush1.bf16.msra.mxu0 %v252
    %352 = vmatprep.subr.bf16.mxu0 0
    %353 = vmatpush1.bf16.msra.mxu0 %v253
    %354 = vmatprep.subr.bf16.mxu0 0
    %355 = vmatpush1.bf16.msra.mxu0 0
    %356 = vmatprep.subr.bf16.mxu0 0
    %357 = vmatpush1.bf16.msra.mxu0 0
    %358 = vmatprep.subr.bf16.mxu0 0
    %359 = vmatpush1.bf16.msra.mxu0 0
    %360 = vmatprep.subr.bf16.mxu0 0
    %361 = vmatpush1.bf16.msra.mxu0 0
    %362 = vmatprep.subr.bf16.mxu0 0
    %363 = vmatpush1.bf16.msra.mxu0 0
    %364 = vmatprep.subr.bf16.mxu0 0
    %365 = vmatpush1.bf16.msra.mxu0 0
    %366 = vmatprep.subr.bf16.mxu0 0
    %367 = vmatpush1.bf16.msra.mxu0 0
    %368 = vmatprep.mubr.bf16.mxu0 %v294
    %369 = vmatmul.mubr.bf16.gmra.mrb[0].mxu0 %v290
    %v370 = vpop.f32.mrb[0].mxu0
    %v371 = vadd.f32 %v331, %v370
    %v372 = vpop.f32.mrb[0].mxu0
    %v373 = vpop.f32.mrb[0].mxu0
    %v374 = vpop.f32.mrb[0].mxu0
    %375 = vdwg.mxu0
    %v376 = vld [vmem:[%s3] sm:$0x3f]
    %378 = vset.pattern.permute.xlu0 0
    %379 = vperm.xlu0 %378, %v376
    %v380 = vpop.permute.xlu0 %379
    %v382 = vmul.f32 %v371, %v380
    %vm383 = vcmask 259072
    %384 = vst.msk [vmem:[%s4] sm:$0x3f] %vm383, %v382
    // Predicated region
    $region18: #{tpu_custom_call.1} parent=1 // pred_check
      _
    $region19: #{tpu_custom_call.1} parent=1 // pred_check_branch
      %386 = sbr.rel (0) target = $region21
    $region20: #{tpu_custom_call.1} parent=1 // pred_region
      _
    $region21: #{tpu_custom_call.1} parent=1 // pred_fallthru
      _
    // Predicated region
    $region22: #{tpu_custom_call.1} parent=1 // pred_check
      _
    $region23: #{tpu_custom_call.1} parent=1 // pred_check_branch
      %388 = sbr.rel (0) target = $region25
    $region24: #{tpu_custom_call.1} parent=1 // pred_region
      %s390 = ssub.s32 128, 128
      %391 = vsyncadd [#allocation3], %s390
      %s392 = sshll.u32 [#allocation2], 4
      %s393 = int_to_ptr.vmem [resolvable:$true] %s392
      %398 = dma.vmem_to_hbm [thread:$0]  %s393, 128, %s5, [#allocation3], 64, 64, 4
    $region25: #{tpu_custom_call.1} parent=1 // pred_fallthru
      _
    // Predicated region
    $region26: #{tpu_custom_call.1} parent=1 // pred_check
      _
    $region27: #{tpu_custom_call.1} parent=1 // pred_check_branch
      %400 = sbr.rel (0) target = $region29
    $region28: #{tpu_custom_call.1} parent=1 // pred_region
      _
    $region29: #{tpu_custom_call.1} parent=1 // pred_fallthru
      _
    // Predicated region
    $region30: #{tpu_custom_call.1} parent=1 // pred_check
      _
    $region31: #{tpu_custom_call.1} parent=1 // pred_check_branch
      %402 = sbr.rel (0) target = $region33
    $region32: #{tpu_custom_call.1} parent=1 // pred_region
      %403 = dma.done [#allocation3], 128
    $region33: #{tpu_custom_call.1} parent=1 // pred_fallthru
      _
    %404 = vsyncpa [#allocation3], 1

</llo_original>
